<compile_context>
chip_gen: v7x
topology: tpu7x:2x2x1
jax: 0.10.0
libtpu: 0.0.40
codegen_flags: <defaults>
</compile_context>

<pallas_src>
import functools

import jax
import jax.numpy as jnp
from jax.experimental import pallas as pl
from jax.experimental.pallas import tpu as pltpu


def _raloss_kernel(packed_ref, out_ref, *, scale):
    # packed_ref: [2, N, B] f32 in VMEM; row 0 = alphas_max, row 1 = alphas_org.
    x = packed_ref[...]
    diff = x[1] - x[0]                         # alphas_org - alphas_max
    # 10/exp(amax - aorg) == 10*exp(aorg - amax); scale = 10/batch folded at trace time.
    out_ref[0, 0] = scale * jnp.sum(jnp.exp(diff))


def _ra_loss_pallas(packed):
    """packed: [2, N, B] f32. Returns scalar loss."""
    _, _, batch = packed.shape
    scale = 10.0 / float(batch)
    out = pl.pallas_call(
        functools.partial(_raloss_kernel, scale=scale),
        out_shape=jax.ShapeDtypeStruct((1, 1), jnp.float32),
        in_specs=[pl.BlockSpec(memory_space=pltpu.MemorySpace.VMEM)],
        out_specs=pl.BlockSpec(memory_space=pltpu.MemorySpace.SMEM),
    )(packed)
    return out[0, 0]


@jax.custom_vjp
def _ra_loss_packed(packed):
    return _ra_loss_pallas(packed)


def _ra_loss_fwd(packed):
    return _ra_loss_pallas(packed), packed


def _ra_loss_bwd(packed, g):
    # loss = (10/B) * sum exp(aorg - amax)
    amax, aorg = packed[0], packed[1]
    batch = packed.shape[-1]
    per = (10.0 / batch) * jnp.exp(aorg - amax)
    d_amax = -g * per
    d_aorg = g * per
    return (jnp.stack([d_amax, d_aorg]),)


_ra_loss_packed.defvjp(_ra_loss_fwd, _ra_loss_bwd)


def ra_loss(alphas_max, alphas_org):
    """alphas_max / alphas_org: lists of [B]-shaped arrays (same length)."""
    amax = jnp.stack([jnp.asarray(a, jnp.float32) for a in alphas_max])  # [N, B]
    aorg = jnp.stack([jnp.asarray(a, jnp.float32) for a in alphas_org])  # [N, B]
    packed = jnp.stack([amax, aorg])                                     # [2, N, B]
    return _ra_loss_packed(packed)


def ra_loss_ref(alphas_max, alphas_org):
    """Plain-JAX reference mirroring the PyTorch double loop."""
    loss = 0.0
    batch = alphas_org[0].shape[0]
    for i in range(len(alphas_org)):
        loss_wt = 0.0
        for j in range(batch):
            loss_wt += 10.0 / jnp.exp(alphas_max[i][j] - alphas_org[i][j])
        loss += loss_wt / batch
    return loss


if __name__ == "__main__":
    key = jax.random.PRNGKey(0)
    num_layers = 3   # length of the alphas lists
    batch = 2

    keys = jax.random.split(key, 2 * num_layers)
    alphas_max = [
        jax.random.normal(keys[i], (batch,), dtype=jnp.float32)
        for i in range(num_layers)
    ]
    alphas_org = [
        jax.random.normal(keys[num_layers + i], (batch,), dtype=jnp.float32)
        for i in range(num_layers)
    ]

    loss = jax.block_until_ready(ra_loss(alphas_max, alphas_org))
    ref = jax.block_until_ready(ra_loss_ref(alphas_max, alphas_org))
    assert jnp.allclose(loss, ref, rtol=1e-5, atol=1e-5), (loss, ref)

    # Gradient sanity check (custom_vjp avoids differentiating through pallas_call).
    g_kernel = jax.grad(
        lambda m, o: ra_loss(list(m), list(o)))(jnp.stack(alphas_max), jnp.stack(alphas_org))
    g_ref = jax.grad(
        lambda m, o: ra_loss_ref(list(m), list(o)))(jnp.stack(alphas_max), jnp.stack(alphas_org))
    g_kernel = jax.block_until_ready(g_kernel)
    g_ref = jax.block_until_ready(g_ref)
    assert jnp.allclose(g_kernel, g_ref, rtol=1e-5, atol=1e-5), (g_kernel, g_ref)

    print("KERNEL_OK")
</pallas_src>

<mosaic_0001>
module attributes {stable_mosaic.version = 11 : i64} {
  func.func @_raloss_kernel(%arg0: memref<2x3x2xf32, #tpu.memory_space<vmem>>, %arg1: memref<1x1xf32, #tpu.memory_space<smem>>) attributes {dimension_semantics = [], scalar_prefetch = 0 : i64, scratch_operands = 0 : i64, tpu.core_type = #tpu.core_type<tc>} {
    %c0 = arith.constant 0 : index
    %c0_0 = arith.constant 0 : index
    %c0_1 = arith.constant 0 : index
    %0 = vector.load %arg0[%c0, %c0_0, %c0_1] : memref<2x3x2xf32, #tpu.memory_space<vmem>>, vector<2x3x2xf32>
    %1 = vector.extract_strided_slice %0 {offsets = [1, 0, 0], sizes = [1, 3, 2], strides = [1, 1, 1]} : vector<2x3x2xf32> to vector<1x3x2xf32>
    %2 = vector.shape_cast %1 : vector<1x3x2xf32> to vector<3x2xf32>
    %3 = vector.extract_strided_slice %0 {offsets = [0, 0, 0], sizes = [1, 3, 2], strides = [1, 1, 1]} : vector<2x3x2xf32> to vector<1x3x2xf32>
    %4 = vector.shape_cast %3 : vector<1x3x2xf32> to vector<3x2xf32>
    %5 = arith.subf %2, %4 : vector<3x2xf32>
    %6 = math.exp %5 : vector<3x2xf32>
    %7 = vector.shape_cast %6 : vector<3x2xf32> to vector<1x3x2xf32>
    %cst = arith.constant dense<0.000000e+00> : vector<1xf32>
    %8 = vector.multi_reduction <add>, %7, %cst [1, 2] : vector<1x3x2xf32> to vector<1xf32>
    %9 = vector.shape_cast %8 : vector<1xf32> to vector<1x1x1xf32>
    %10 = vector.extract %9[0, 0, 0] : f32 from vector<1x1x1xf32>
    %cst_2 = arith.constant 5.000000e+00 : f32
    %11 = arith.mulf %cst_2, %10 : f32
    %c0_3 = arith.constant 0 : index
    %c0_4 = arith.constant 0 : index
    %12 = memref.load %arg1[%c0_3, %c0_4] : memref<1x1xf32, #tpu.memory_space<smem>>
    memref.store %11, %arg1[%c0_3, %c0_4] : memref<1x1xf32, #tpu.memory_space<smem>>
    return
  }
}

</mosaic_0001>

<llo_original>
// kernel: tpu_custom_call.1
$region0: #{tpu_custom_call.1}
  #allocation0 [shape = 'u32[]', space=smem, size = 0x4, offset = 0x4, fixed_abs, tag = 'smem constant byte address 0x4 - core index']
  #allocation1 [shape = 'u32[144,128]{1,0:T(1,128)}', space=vmem, size = 0x12000, scoped, tag = 'internal scratch']
  %s0 = inlined_call_operand.vmem [shape: f32[2,3,2], index: 0, kind: input, shape index: {}]
  %s1 = inlined_call_operand.hbm [shape: f32[1,1], index: 1, kind: output, shape index: {}]
  %s2 = sld [smem:[#allocation0]]
  $region14: #{tpu_custom_call.1} parent=0
    _
  %s4 = ssub.s32 1, %s2
  %s5 = scalar_select 0, %s4, %s2
  $region1: #{tpu_custom_call.1} parent=0
    #allocation2 [shape = 'u8[512]{0}', space=smem, size = 0x200, scoped, tag = 'output window, operand 0, single buffered']
    #allocation3 [shape = 's32[1]{0}', space=sflag, size = 0x4, scoped, tag = 'scoped memory for tpu_custom_call.1']
    %6 = vsyncpa [#allocation3], 0
    // Predicated region
    $region2: #{tpu_custom_call.1} parent=1 // pred_check
      _
    $region3: #{tpu_custom_call.1} parent=1 // pred_check_branch
      %8 = sbr.rel (0) target = $region5
    $region4: #{tpu_custom_call.1} parent=1 // pred_region
      _
    $region5: #{tpu_custom_call.1} parent=1 // pred_fallthru
      _
    %v9 = vld [vmem:[%s0] sm:$0x7]
    %v10 = vld [vmem:[%s0 + $0x4] sm:$0x7]
    %v11 = vsub.f32 %v10, %v9
    %v12 = vmul.f32 %v11, 1.442695
    %v13 = vpow.pop %v12
    %vm14 = vcmask 10240
    %v15 = vsel %vm14, %v13, 0.0
    %16 = vadd.xlane.f32.xlu0 %v15
    %v17 = vpop.xlane.xlu0 %16
    %v18 = vrot.slane %v17, 4
    %v19 = vadd.f32 %v17, %v18
    %v20 = vrot.slane %v19, 2
    %v21 = vadd.f32 %v19, %v20
    %v22 = vrot.slane %v21, 1
    %v23 = vadd.f32 %v21, %v22
    %s24 = vtos %v23
    %s25 = smul.f32 %s24, 5.0
    %s26 = scalar_lea.smem [#allocation2], 0
    %27 = sst [smem:[%s26]] %s25
    // Predicated region
    $region6: #{tpu_custom_call.1} parent=1 // pred_check
      _
    $region7: #{tpu_custom_call.1} parent=1 // pred_check_branch
      %29 = sbr.rel (0) target = $region9
    $region8: #{tpu_custom_call.1} parent=1 // pred_region
      %s31 = ssub.s32 16, 16
      %32 = vsyncadd [#allocation3], %s31
      %35 = dma.smem_to_hbm [#allocation2], 16, %s1, [#allocation3]
    $region9: #{tpu_custom_call.1} parent=1 // pred_fallthru
      _
    // Predicated region
    $region10: #{tpu_custom_call.1} parent=1 // pred_check
      _
    $region11: #{tpu_custom_call.1} parent=1 // pred_check_branch
      %37 = sbr.rel (0) target = $region13
    $region12: #{tpu_custom_call.1} parent=1 // pred_region
      %38 = dma.done [#allocation3], 16
    $region13: #{tpu_custom_call.1} parent=1 // pred_fallthru
      _
    %39 = sfence
    %40 = vsyncpa [#allocation3], 1

</llo_original>
